<compile_context>
chip_gen: v7x
topology: tpu7x:2x2x1
jax: 0.10.0
libtpu: 0.0.40
codegen_flags: <defaults>
</compile_context>

<pallas_src>
import functools

import jax
import jax.numpy as jnp
from jax.experimental import pallas as pl
from jax.experimental.pallas import tpu as pltpu


def _layernorm_kernel(x_ref, w_ref, b_ref, o_ref, *, eps):
    # x_ref: (block_rows, H); w_ref/b_ref: (1, H), already f32.
    x = x_ref[...].astype(jnp.float32)
    u = jnp.mean(x, axis=-1, keepdims=True)           # row mean
    d = x - u
    s = jnp.mean(d * d, axis=-1, keepdims=True)       # biased variance (== .pow(2).mean(-1))
    inv = jax.lax.rsqrt(s + eps)                      # eps inside sqrt (TF style), EUP rsqrt
    o_ref[...] = (w_ref[...] * (d * inv) + b_ref[...]).astype(o_ref.dtype)


def _vmem_capacity_bytes():
    """Physical per-core VMEM; conservative 64 MiB fallback if unavailable."""
    try:
        info = pltpu.get_tpu_info()
        cap = getattr(info, "vmem_capacity_bytes", None)
        if cap:
            return int(cap)
    except Exception:
        pass
    return 64 << 20


def _pack_rows(dtype):
    """Sublane packing factor: 8 rows for f32, 16 for bf16, 32 for int8/fp8."""
    itemsize = jnp.dtype(dtype).itemsize
    return 8 * max(1, 4 // max(itemsize, 1))


def _round_up(n, m):
    return -(-n // m) * m


def _pick_block_rows(num_rows, hidden, dtype, vmem_capacity):
    """Row tile sized by per-step DMA bytes and a generation-aware VMEM budget."""
    pack = _pack_rows(dtype)
    itemsize = jnp.dtype(dtype).itemsize

    dma_bytes_per_row = 2 * hidden * itemsize           # one input + one output row per step
    vmem_bytes_per_row = (2 * 2 * hidden * itemsize     # double-buffered in + out DMA slabs
                          + 3 * hidden * 4)             # f32 working copies inside the kernel

    target_step_bytes = 4 << 20                         # aim for ~4 MiB of HBM traffic per step
    min_step_bytes = 1 << 20                            # never fall below ~1 MiB per step

    rows = max(1, target_step_bytes // dma_bytes_per_row)
    min_rows = max(pack, -(-min_step_bytes // dma_bytes_per_row))

    # 512-row tiles already hit ~85% of HBM roofline for BERT-size H; small H
    # needs much taller tiles to keep the per-step transfer above the floor.
    rows = min(rows, 512 if hidden >= 512 else 8192)

    # Target >= 8 grid steps (>= 4 per TensorCore on v7x) when row count allows,
    # but not at the expense of the per-step DMA floor.
    rows_for_8_steps = -(-num_rows // 8)
    rows = min(rows, max(rows_for_8_steps, min_rows))

    # Generation-aware VMEM budget (buffers + f32 temporaries).
    tile_budget = (22 << 20) if vmem_capacity <= (64 << 20) else (48 << 20)
    rows = min(rows, max(pack, tile_budget // vmem_bytes_per_row))

    # No point in a block taller than all rows; round to the packing factor.
    rows = min(rows, _round_up(num_rows, pack))
    rows = max(pack, (rows // pack) * pack)
    return int(rows)


def bert_layer_norm(x, weight, bias, eps=1e-12, block_rows=None):
    """x: (..., H); weight, bias: (H,). Returns same shape/dtype as x."""
    orig_shape = x.shape
    H = orig_shape[-1]
    x2 = x.reshape(-1, H)
    R = x2.shape[0]

    vmem_capacity = _vmem_capacity_bytes()
    if block_rows is None:
        block_rows = _pick_block_rows(R, H, x2.dtype, vmem_capacity)
    assert block_rows % 8 == 0, "block_rows must be a multiple of 8 (sublane tiling)"

    # Params are tiny (H elements): cast to f32 once here so the kernel body
    # does not redo the cast/broadcast on every grid step.
    w2 = weight.astype(jnp.float32).reshape(1, H)
    b2 = bias.astype(jnp.float32).reshape(1, H)

    # Ragged tail handled by Pallas partial blocks -> no whole-tensor copy.
    grid = (pl.cdiv(R, block_rows),)

    # Scoped VMEM limit: double-buffered in+out DMA slabs + f32 temporaries,
    # floored at 32 MiB (v5e's default scoped limit is only 16 MiB), capped
    # generation-aware (48 MiB on 64 MiB/TC chips, 100 MiB on 128 MiB chips).
    itemsize = x2.dtype.itemsize
    dma_tile_bytes = 2 * (2 * block_rows * H * itemsize)
    work_tile_bytes = 3 * block_rows * H * 4
    vmem_cap = (48 << 20) if vmem_capacity <= (64 << 20) else (100 << 20)
    vmem_limit_bytes = int(min(max(dma_tile_bytes + work_tile_bytes + (4 << 20), 32 << 20),
                               vmem_cap))

    out = pl.pallas_call(
        functools.partial(_layernorm_kernel, eps=eps),
        out_shape=jax.ShapeDtypeStruct((R, H), x.dtype),
        grid_spec=pltpu.PrefetchScalarGridSpec(
            num_scalar_prefetch=0,
            grid=grid,
            in_specs=[
                pl.BlockSpec((block_rows, H), lambda i: (i, 0)),
                pl.BlockSpec((1, H), lambda i: (0, 0)),
                pl.BlockSpec((1, H), lambda i: (0, 0)),
            ],
            out_specs=pl.BlockSpec((block_rows, H), lambda i: (i, 0)),
        ),
        compiler_params=pltpu.CompilerParams(
            dimension_semantics=("parallel",),
            vmem_limit_bytes=vmem_limit_bytes,
        ),
    )(x2, w2, b2)

    return out.reshape(orig_shape)


if __name__ == "__main__":
    eps = 1e-12
    hidden = 32

    def reference(x, weight, bias):
        xf = x.astype(jnp.float32)
        u = jnp.mean(xf, axis=-1, keepdims=True)
        s = jnp.mean((xf - u) ** 2, axis=-1, keepdims=True)
        y = weight.astype(jnp.float32) * ((xf - u) / jnp.sqrt(s + eps)) + bias.astype(jnp.float32)
        return y.astype(x.dtype)

    key = jax.random.PRNGKey(0)
    kx, kw, kb, kx2, kx3 = jax.random.split(key, 5)

    # Non-trivial (but deterministic) affine params to exercise weight/bias.
    weight = 1.0 + 0.1 * jax.random.normal(kw, (hidden,), dtype=jnp.float32)
    bias = 0.1 * jax.random.normal(kb, (hidden,), dtype=jnp.float32)

    # Case 1: evenly tiled rows (batch=2, seq=8 -> R=16), f32.
    x = jax.random.normal(kx, (2, 8, hidden), dtype=jnp.float32)
    out = jax.block_until_ready(bert_layer_norm(x, weight, bias, eps=eps))
    ref = reference(x, weight, bias)
    assert out.shape == x.shape and out.dtype == x.dtype
    assert jnp.max(jnp.abs(out - ref)) < 1e-5

    # Case 2: ragged row count (3*5=15 rows) -> partial last block path,
    # no host-side padding copy.
    x_ragged = jax.random.normal(kx2, (3, 5, hidden), dtype=jnp.float32)
    out_ragged = jax.block_until_ready(bert_layer_norm(x_ragged, weight, bias, eps=eps))
    ref_ragged = reference(x_ragged, weight, bias)
    assert out_ragged.shape == x_ragged.shape
    assert jnp.max(jnp.abs(out_ragged - ref_ragged)) < 1e-5

    # Case 3: bf16 input -> exercises the 16-row sublane-packing tile rounding
    # and the f32-accumulate / cast-back path.
    x_bf16 = jax.random.normal(kx3, (2, 8, hidden), dtype=jnp.float32).astype(jnp.bfloat16)
    out_bf16 = jax.block_until_ready(bert_layer_norm(x_bf16, weight, bias, eps=eps))
    ref_bf16 = reference(x_bf16, weight, bias)
    assert out_bf16.shape == x_bf16.shape and out_bf16.dtype == jnp.bfloat16
    assert jnp.max(jnp.abs(out_bf16.astype(jnp.float32) - ref_bf16.astype(jnp.float32))) < 2e-2

    print("KERNEL_OK")
</pallas_src>

<mosaic_0001>
module attributes {stable_mosaic.version = 11 : i64} {
  func.func @_layernorm_kernel(%arg0: i32, %arg1: memref<16x32xf32, #tpu.memory_space<vmem>>, %arg2: memref<1x32xf32, #tpu.memory_space<vmem>>, %arg3: memref<1x32xf32, #tpu.memory_space<vmem>>, %arg4: memref<16x32xf32, #tpu.memory_space<vmem>>) attributes {dimension_semantics = [#tpu.dimension_semantics<parallel>], iteration_bounds = array<i64: 1>, scalar_prefetch = 0 : i64, scratch_operands = 0 : i64, tpu.core_type = #tpu.core_type<tc>, window_params = [{transform_indices = @transform_0, window_bounds = array<i64: 16, 32>}, {pipeline_mode = #tpu.pipeline_mode<synchronous>, transform_indices = @transform_1, window_bounds = array<i64: 1, 32>}, {pipeline_mode = #tpu.pipeline_mode<synchronous>, transform_indices = @transform_2, window_bounds = array<i64: 1, 32>}, {transform_indices = @transform_3, window_bounds = array<i64: 16, 32>}]} {
    %c0 = arith.constant 0 : index
    %c0_0 = arith.constant 0 : index
    %0 = vector.load %arg1[%c0, %c0_0] : memref<16x32xf32, #tpu.memory_space<vmem>>, vector<16x32xf32>
    %cst = arith.constant dense<0.000000e+00> : vector<16xf32>
    %1 = vector.multi_reduction <add>, %0, %cst [1] : vector<16x32xf32> to vector<16xf32>
    %2 = vector.shape_cast %1 : vector<16xf32> to vector<16x1xf32>
    %cst_1 = arith.constant 3.200000e+01 : f32
    %3 = vector.broadcast %cst_1 : f32 to vector<16x1xf32>
    %4 = arith.divf %2, %3 : vector<16x1xf32>
    %5 = vector.broadcast %4 : vector<16x1xf32> to vector<16x32xf32>
    %6 = arith.subf %0, %5 : vector<16x32xf32>
    %7 = arith.mulf %6, %6 : vector<16x32xf32>
    %cst_2 = arith.constant dense<0.000000e+00> : vector<16xf32>
    %8 = vector.multi_reduction <add>, %7, %cst_2 [1] : vector<16x32xf32> to vector<16xf32>
    %9 = vector.shape_cast %8 : vector<16xf32> to vector<16x1xf32>
    %cst_3 = arith.constant 3.200000e+01 : f32
    %10 = vector.broadcast %cst_3 : f32 to vector<16x1xf32>
    %11 = arith.divf %9, %10 : vector<16x1xf32>
    %cst_4 = arith.constant 9.99999996E-13 : f32
    %12 = vector.broadcast %cst_4 : f32 to vector<16x1xf32>
    %13 = arith.addf %11, %12 : vector<16x1xf32>
    %14 = math.rsqrt %13 : vector<16x1xf32>
    %c0_5 = arith.constant 0 : index
    %c0_6 = arith.constant 0 : index
    %15 = vector.load %arg2[%c0_5, %c0_6] : memref<1x32xf32, #tpu.memory_space<vmem>>, vector<1x32xf32>
    %16 = vector.broadcast %14 : vector<16x1xf32> to vector<16x32xf32>
    %17 = arith.mulf %6, %16 : vector<16x32xf32>
    %18 = vector.broadcast %15 : vector<1x32xf32> to vector<16x32xf32>
    %19 = arith.mulf %18, %17 : vector<16x32xf32>
    %c0_7 = arith.constant 0 : index
    %c0_8 = arith.constant 0 : index
    %20 = vector.load %arg3[%c0_7, %c0_8] : memref<1x32xf32, #tpu.memory_space<vmem>>, vector<1x32xf32>
    %21 = vector.broadcast %20 : vector<1x32xf32> to vector<16x32xf32>
    %22 = arith.addf %19, %21 : vector<16x32xf32>
    %c0_9 = arith.constant 0 : index
    %c0_10 = arith.constant 0 : index
    %23 = vector.load %arg4[%c0_9, %c0_10] : memref<16x32xf32, #tpu.memory_space<vmem>>, vector<16x32xf32>
    tpu.vector_store %arg4[%c0_9, %c0_10], %22 {strides = array<i32>} : memref<16x32xf32, #tpu.memory_space<vmem>>, vector<16x32xf32>,
    return
  }
  func.func @transform_0(%arg0: i32) -> (i32, i32) {
    %c0_i32 = arith.constant 0 : i32
    %c0_i32_0 = arith.constant 0 : i32
    return %arg0, %c0_i32 : i32, i32
  }
  func.func @transform_1(%arg0: i32) -> (i32, i32) {
    %c0_i32 = arith.constant 0 : i32
    %c0_i32_0 = arith.constant 0 : i32
    %c0_i32_1 = arith.constant 0 : i32
    return %c0_i32, %c0_i32_0 : i32, i32
  }
  func.func @transform_2(%arg0: i32) -> (i32, i32) {
    %c0_i32 = arith.constant 0 : i32
    %c0_i32_0 = arith.constant 0 : i32
    %c0_i32_1 = arith.constant 0 : i32
    return %c0_i32, %c0_i32_0 : i32, i32
  }
  func.func @transform_3(%arg0: i32) -> (i32, i32) {
    %c0_i32 = arith.constant 0 : i32
    %c0_i32_0 = arith.constant 0 : i32
    return %arg0, %c0_i32 : i32, i32
  }
}

</mosaic_0001>

<llo_original>
// kernel: tpu_custom_call.1
$region0: #{tpu_custom_call.1}
  #allocation0 [shape = 'u32[]', space=smem, size = 0x4, offset = 0x4, fixed_abs, tag = 'smem constant byte address 0x4 - core index']
  #allocation1 [shape = 'u32[144,128]{1,0:T(1,128)}', space=vmem, size = 0x12000, scoped, tag = 'internal scratch']
  %s0 = inlined_call_operand.hbm [shape: f32[16,32], index: 0, kind: input, shape index: {}]
  %s1 = inlined_call_operand.vmem [shape: f32[1,32], index: 1, kind: input, shape index: {}]
  %s2 = inlined_call_operand.vmem [shape: f32[1,32], index: 2, kind: input, shape index: {}]
  %s3 = inlined_call_operand.hbm [shape: f32[16,32], index: 3, kind: output, shape index: {}]
  %s4 = sld [smem:[#allocation0]]
  $region26: #{tpu_custom_call.1} parent=0
    _
  %s6 = ssub.s32 1, %s4
  %s7 = scalar_select 0, %s6, %s4
  $region1: #{tpu_custom_call.1} parent=0
    #allocation2 [shape = 'u8[8192]{0}', space=vmem, size = 0x2000, scoped, tag = 'input window, operand 0, single buffered']
    #allocation3 [shape = 's32[1]{0}', space=sflag, size = 0x4, scoped, tag = 'scoped memory for tpu_custom_call.1']
    #allocation4 [shape = 's32[1]{0}', space=sflag, size = 0x4, scoped, tag = 'scoped memory for tpu_custom_call.1']
    #allocation5 [shape = 'u8[8192]{0}', space=vmem, size = 0x2000, scoped, tag = 'output window, operand 0, single buffered']
    %8 = vsyncpa [#allocation3], 0
    %9 = vsyncpa [#allocation4], 0
    // Predicated region
    $region2: #{tpu_custom_call.1} parent=1 // pred_check
      _
    $region3: #{tpu_custom_call.1} parent=1 // pred_check_branch
      %11 = sbr.rel (0) target = $region5
    $region4: #{tpu_custom_call.1} parent=1 // pred_region
      %s13 = ssub.s32 256, 256
      %14 = vsyncadd [#allocation3], %s13
      %s15 = sshll.u32 [#allocation2], 4
      %s16 = int_to_ptr.vmem [resolvable:$true] %s15
      %21 = dma.hbm_to_vmem [thread:$0]  %s0, 256, %s16, [#allocation3], 128, 128, 8
    $region5: #{tpu_custom_call.1} parent=1 // pred_fallthru
      _
    // Predicated region
    $region6: #{tpu_custom_call.1} parent=1 // pred_check
      _
    $region7: #{tpu_custom_call.1} parent=1 // pred_check_branch
      %23 = sbr.rel (0) target = $region9
    $region8: #{tpu_custom_call.1} parent=1 // pred_region
      _
    $region9: #{tpu_custom_call.1} parent=1 // pred_fallthru
      _
    // Predicated region
    $region10: #{tpu_custom_call.1} parent=1 // pred_check
      _
    $region11: #{tpu_custom_call.1} parent=1 // pred_check_branch
      %25 = sbr.rel (0) target = $region13
    $region12: #{tpu_custom_call.1} parent=1 // pred_region
      _
    $region13: #{tpu_custom_call.1} parent=1 // pred_fallthru
      _
    // Predicated region
    $region14: #{tpu_custom_call.1} parent=1 // pred_check
      _
    $region15: #{tpu_custom_call.1} parent=1 // pred_check_branch
      %27 = sbr.rel (0) target = $region17
    $region16: #{tpu_custom_call.1} parent=1 // pred_region
      %28 = dma.done [#allocation3], 256
    $region17: #{tpu_custom_call.1} parent=1 // pred_fallthru
      _
    %v29 = vld [vmem:[#allocation2] sm:$0xff]
    %v30 = vld [vmem:[#allocation2 + $0x8] sm:$0xff]
    %vm31 = vcmask 261120
    %v32 = vsel %vm31, %v29, 0.0
    %33 = vadd.xlane.f32.xlu0 %v32
    %v34 = vpop.xlane.xlu0 %33
    %v35 = vsel %vm31, %v30, 0.0
    %36 = vadd.xlane.f32.xlu0 %v35
    %v37 = vpop.xlane.xlu0 %36
    %v38 = vrcp.pop 32.0
    %v39 = vmul.f32 %v34, %v38
    %v40 = vmul.f32 %v37, %v38
    %v41 = vsub.f32 %v29, %v39
    %v42 = vsub.f32 %v30, %v40
    %v43 = vmul.f32 %v41, %v41
    %v44 = vmul.f32 %v42, %v42
    %v45 = vsel %vm31, %v43, 0.0
    %46 = vadd.xlane.f32.xlu0 %v45
    %v47 = vpop.xlane.xlu0 %46
    %v48 = vsel %vm31, %v44, 0.0
    %49 = vadd.xlane.f32.xlu0 %v48
    %v50 = vpop.xlane.xlu0 %49
    %v51 = vmul.f32 %v47, %v38
    %v52 = vmul.f32 %v50, %v38
    %v53 = vadd.f32 %v51, 1e-12
    %v54 = vadd.f32 %v52, 1e-12
    %v55 = vrsqrt.pop %v53
    %v56 = vrsqrt.pop %v54
    %v57 = vld [vmem:[%s1] sm:$0x1]
    %v58 = vmul.f32 %v41, %v55
    %v59 = vmul.f32 %v42, %v56
    %v61 = vlaneseq
    %v62 = vshrl.u32 %v61, 7
    %v63 = vsub.s32 0, %v62
    %v64 = vrot.slane %v57, %v63
    %v66 = vmul.f32 %v64, %v58
    %v67 = vmul.f32 %v64, %v59
    %v68 = vld [vmem:[%s2] sm:$0x1]
    %v70 = vlaneseq
    %v71 = vshrl.u32 %v70, 7
    %v72 = vsub.s32 0, %v71
    %v73 = vrot.slane %v68, %v72
    %v75 = vadd.f32 %v66, %v73
    %v76 = vadd.f32 %v67, %v73
    %77 = vst.msk [vmem:[#allocation5] sm:$0xff] %vm31, %v75
    %78 = vst.msk [vmem:[#allocation5 + $0x8] sm:$0xff] %vm31, %v76
    // Predicated region
    $region18: #{tpu_custom_call.1} parent=1 // pred_check
      _
    $region19: #{tpu_custom_call.1} parent=1 // pred_check_branch
      %80 = sbr.rel (0) target = $region21
    $region20: #{tpu_custom_call.1} parent=1 // pred_region
      %s82 = ssub.s32 256, 256
      %83 = vsyncadd [#allocation4], %s82
      %s84 = sshll.u32 [#allocation5], 4
      %s85 = int_to_ptr.vmem [resolvable:$true] %s84
      %90 = dma.vmem_to_hbm [thread:$0]  %s85, 256, %s3, [#allocation4], 128, 128, 8
    $region21: #{tpu_custom_call.1} parent=1 // pred_fallthru
      _
    // Predicated region
    $region22: #{tpu_custom_call.1} parent=1 // pred_check
      _
    $region23: #{tpu_custom_call.1} parent=1 // pred_check_branch
      %92 = sbr.rel (0) target = $region25
    $region24: #{tpu_custom_call.1} parent=1 // pred_region
      %93 = dma.done [#allocation4], 256
    $region25: #{tpu_custom_call.1} parent=1 // pred_fallthru
      _
    %94 = vsyncpa [#allocation3], 1
    %95 = vsyncpa [#allocation4], 1

</llo_original>
